<compile_context>
chip_gen: v7x
topology: tpu7x:2x2x1
jax: 0.10.0
libtpu: 0.0.40
codegen_flags: <defaults>
</compile_context>

<pallas_src>
import functools

import jax
import jax.numpy as jnp
from jax import lax
from jax.experimental import pallas as pl
from jax.experimental.pallas import tpu as pltpu


_VMEM = pl.BlockSpec(memory_space=pltpu.MemorySpace.VMEM)
_BF16 = jnp.bfloat16
_F32 = jnp.float32


# ---------------------------------------------------------------------------
# Kernel 1: fused bidirectional encoder LSTM recurrence
# ---------------------------------------------------------------------------
def enc_bilstm_kernel(gx_ref, whh_ref, out_ref, hfin_ref, cfin_ref, *, H, S, B):
    # gx_ref : (S, B, 8H) f32 time-major input gates + biases, lane order
    #          [i_f i_r | f_f f_r | g_f g_r | o_f o_r]; the reverse-direction
    #          columns are already time-reversed (loop step t holds the reverse
    #          direction's input gates for original time S-1-t).
    # whh_ref: (2H, 8H) bf16 block recurrent weight (same column order); rows
    #          0:H act on the forward hidden state, rows H:2H on the reverse.
    whh = whh_ref[...]
    h = jnp.zeros((B, 2 * H), _F32)          # [h_fwd | h_rev] lane blocks
    c = jnp.zeros((B, 2 * H), _F32)
    h_b = h.astype(_BF16)
    # TODO(synk): for production S use lax.fori_loop(..., unroll=2..4) with
    #             pl.ds/pl.multiple_of indexed stores instead of full unroll.
    for t in range(S):
        gates = gx_ref[t] + jnp.dot(h_b, whh, preferred_element_type=_F32)  # (B,8H)
        i = jax.nn.sigmoid(gates[:, 0:2 * H])
        f = jax.nn.sigmoid(gates[:, 2 * H:4 * H])
        g = jnp.tanh(gates[:, 4 * H:6 * H])
        o = jax.nn.sigmoid(gates[:, 6 * H:8 * H])
        c = f * c + i * g
        h = o * jnp.tanh(c)
        h_b = h.astype(_BF16)
        out_ref[t] = h                       # one contiguous (B, 2H) store / step
    hfin_ref[...] = h
    cfin_ref[...] = c


def encoder_pallas(emb, p, H):
    B, S, E = emb.shape

    # ---- one-time folds (XLA glue, off the serial chain) --------------------
    wih_fT, wih_rT = p["wih_f"].T, p["wih_r"].T          # (E, 4H)
    whh_fT, whh_rT = p["whh_f"].T, p["whh_r"].T          # (H, 4H)

    def ilv(a_f, a_r):   # per-gate interleave: (...,4H),(...,4H) -> (...,8H)
        return jnp.concatenate(
            [a_f[..., 0:H], a_r[..., 0:H],
             a_f[..., H:2 * H], a_r[..., H:2 * H],
             a_f[..., 2 * H:3 * H], a_r[..., 2 * H:3 * H],
             a_f[..., 3 * H:4 * H], a_r[..., 3 * H:4 * H]], axis=-1)

    # input-gate projections have no recurrent dependency -> hoisted entirely
    xg_f = jnp.einsum('bse,ef->bsf', emb, wih_fT)                     # (B,S,4H)
    xg_r = jnp.einsum('bse,ef->bsf', jnp.flip(emb, axis=1), wih_rT)   # time-rev
    gx = ilv(xg_f, xg_r) + ilv(p["b_f"], p["b_r"])                    # (B,S,8H)
    gx_tm = jnp.transpose(gx, (1, 0, 2)).astype(_F32)                 # (S,B,8H)

    # block recurrent weight: fwd hidden rows -> fwd gate cols, rev -> rev cols
    Z = jnp.zeros((H, H), _F32)
    cols = []
    for gidx in range(4):
        cols.append(jnp.concatenate([whh_fT[:, gidx * H:(gidx + 1) * H], Z], 0))
        cols.append(jnp.concatenate([Z, whh_rT[:, gidx * H:(gidx + 1) * H]], 0))
    whh_ilv = jnp.concatenate(cols, axis=1).astype(_BF16)             # (2H,8H)

    # TODO(synk): on v7x add a batch-parallel grid / pl.core_map so the second
    #             TensorCore gets work; a batch grid would serialize on 1-TC chips.
    kernel = functools.partial(enc_bilstm_kernel, H=H, S=S, B=B)
    out_shapes = (jax.ShapeDtypeStruct((S, B, 2 * H), _F32),   # time-major h seq
                  jax.ShapeDtypeStruct((B, 2 * H), _F32),      # final [h_f|h_r]
                  jax.ShapeDtypeStruct((B, 2 * H), _F32))      # final [c_f|c_r]
    out_sm, hfin, cfin = pl.pallas_call(
        kernel, out_shape=out_shapes,
        in_specs=[_VMEM, _VMEM], out_specs=(_VMEM, _VMEM, _VMEM),
    )(gx_tm, whh_ilv)

    # one-time realignment (XLA glue): rev half time-flipped, back to (B,S,2H)
    enc_output = jnp.concatenate(
        [out_sm[:, :, 0:H], jnp.flip(out_sm[:, :, H:2 * H], axis=0)], axis=-1)
    enc_output = jnp.transpose(enc_output, (1, 0, 2))                 # (B,S,2H)
    h_n = jnp.stack([hfin[:, 0:H], hfin[:, H:2 * H]], axis=0)         # (2,B,H)
    c_n = jnp.stack([cfin[:, 0:H], cfin[:, H:2 * H]], axis=0)
    return enc_output, h_n, c_n


# ---------------------------------------------------------------------------
# Kernel 2: teacher-forced decoder loop (LSTM + dot attention + loss + argmax)
# ---------------------------------------------------------------------------
def decoder_kernel(gx_ref, tgt_ref, mask_ref, enc_out_ref, enc_featt_ref,
                   enc_mask_ref, h0_ref, c0_ref,
                   actx_ref, whh_ref, wdfh_ref, wdfc_ref, bdf_ref,
                   wdoh_ref, wdoc_ref, bdo_ref,
                   loss_ref, pred_ref, *, H, T, B, S, V):
    enc_out = enc_out_ref[...]        # (B,S,2H) bf16   attention-context RHS
    enc_featt = enc_featt_ref[...]    # (B,2H,S) bf16   scores RHS (pre-transposed)
    enc_mask = enc_mask_ref[...]      # (B,S)    f32
    actx = actx_ref[...]              # (2H,4H)  bf16   (dec_input_fc folded)
    whh = whh_ref[...]                # (H,4H)   bf16
    wdfh, wdfc = wdfh_ref[...], wdfc_ref[...]        # (H,2H) bf16 each
    wdoh, wdoc = wdoh_ref[...], wdoc_ref[...]        # (H,V), (2H,V) bf16
    bdf = jnp.broadcast_to(bdf_ref[...], (B, 2 * H))   # hoisted bias broadcasts
    bdo = jnp.broadcast_to(bdo_ref[...], (B, V))
    iota_v = lax.broadcasted_iota(jnp.int32, (B, V), 1)

    h = h0_ref[...]                   # (B,H) f32  (decode_init done in wrapper)
    c = c0_ref[...]
    ctx = jnp.zeros((B, 2 * H), _F32)
    h_b, ctx_b = h.astype(_BF16), ctx.astype(_BF16)

    # TODO(synk): for production T/S/V switch to lax.fori_loop, tile enc_out /
    #             enc_feat over S and w_dout over V with BlockSpecs, and set
    #             pltpu.CompilerParams(vmem_limit_bytes=...) (v7x: 64 MiB budget).
    for t in range(T):
        # decoder LSTM step (embedding gate projection hoisted into gx_ref)
        gates = (gx_ref[t]
                 + jnp.dot(ctx_b, actx, preferred_element_type=_F32)
                 + jnp.dot(h_b, whh, preferred_element_type=_F32))       # (B,4H)
        i = jax.nn.sigmoid(gates[:, 0:H])
        f = jax.nn.sigmoid(gates[:, H:2 * H])
        g = jnp.tanh(gates[:, 2 * H:3 * H])
        o = jax.nn.sigmoid(gates[:, 3 * H:4 * H])
        c = f * c + i * g
        h = o * jnp.tanh(c)
        h_b = h.astype(_BF16)
        c_b = c.astype(_BF16)

        # atten(): 'dot' attention; split weights -> no per-step lane concats
        dfeat = (jnp.dot(h_b, wdfh, preferred_element_type=_F32)
                 + jnp.dot(c_b, wdfc, preferred_element_type=_F32) + bdf)  # (B,2H)
        scores = jnp.einsum('bqd,bds->bqs', dfeat.astype(_BF16)[:, None, :],
                            enc_featt, preferred_element_type=_F32)[:, 0, :]  # (B,S)
        # softmax -> *mask -> renorm fused in one pass (Z cancels exactly);
        # NOTE: like the reference, an all-zero enc_mask row would produce NaN.
        e = jnp.exp(scores - jnp.max(scores, axis=-1, keepdims=True)) * enc_mask
        att = e * pl.reciprocal(jnp.sum(e, axis=-1, keepdims=True), approx=True)
        ctx = jnp.einsum('bqs,bsd->bqd', att.astype(_BF16)[:, None, :],
                         enc_out, preferred_element_type=_F32)[:, 0, :]   # (B,2H)
        ctx_b = ctx.astype(_BF16)

        # output projection to vocab
        logits = (jnp.dot(h_b, wdoh, preferred_element_type=_F32)
                  + jnp.dot(ctx_b, wdoc, preferred_element_type=_F32) + bdo)  # (B,V)

        # masked cross-entropy (reduction='none') + greedy argmax (off the
        # recurrent chain; stored time-major, transposed once in the wrapper)
        mx = jnp.max(logits, axis=-1, keepdims=True)                          # (B,1)
        lse = jnp.log(jnp.sum(jnp.exp(logits - mx), axis=-1, keepdims=True)) + mx
        hit = iota_v == tgt_ref[t][:, None]
        tgt_logit = jnp.sum(jnp.where(hit, logits, 0.0), axis=-1, keepdims=True)
        loss_ref[t, :] = (lse - tgt_logit)[:, 0] * mask_ref[t]
        pred_ref[t, :] = jnp.min(jnp.where(logits == mx, iota_v, V),
                                 axis=-1).astype(jnp.int32)


def decoder_pallas(enc_output, enc_masks, dec_emb, dec_tgt_tm, dec_mask_tm,
                   dec_h0, dec_c0, p, H):
    B, S, _ = enc_output.shape
    T, E = dec_emb.shape[1], dec_emb.shape[2]
    V = p["w_dout"].shape[0]

    # ---- one-time folds (XLA glue) ------------------------------------------
    wih_dT = p["wih_d"].T                               # (E,4H)
    a_full = p["w_dec_input"].T @ wih_dT                # (E+2H,4H)  fold dec_input_fc
    a_emb, a_ctx = a_full[0:E], a_full[E:E + 2 * H]
    b_gate = p["b_dec_input"] @ wih_dT + p["b_d"]                       # (4H,)
    gx = jnp.einsum('bte,ef->btf', dec_emb, a_emb) + b_gate             # (B,T,4H)
    gx_tm = jnp.transpose(gx, (1, 0, 2)).astype(_F32)                   # (T,B,4H)

    enc_feat = enc_output @ p["w_eout"].T + p["b_eout"]                 # (B,S,2H)
    enc_featt = jnp.transpose(enc_feat, (0, 2, 1)).astype(_BF16)        # (B,2H,S)

    wdfT = p["w_dfeat"].T                                               # (2H,2H)
    wdoT = p["w_dout"].T                                                # (3H,V)

    kernel = functools.partial(decoder_kernel, H=H, T=T, B=B, S=S, V=V)
    out_shapes = (jax.ShapeDtypeStruct((T, B), _F32),
                  jax.ShapeDtypeStruct((T, B), jnp.int32))
    args = (gx_tm, dec_tgt_tm, dec_mask_tm,
            enc_output.astype(_BF16), enc_featt, enc_masks,
            dec_h0, dec_c0,
            a_ctx.astype(_BF16), p["whh_d"].T.astype(_BF16),
            wdfT[0:H].astype(_BF16), wdfT[H:2 * H].astype(_BF16),
            p["b_dfeat"].reshape(1, -1),
            wdoT[0:H].astype(_BF16), wdoT[H:3 * H].astype(_BF16),
            p["b_dout"].reshape(1, -1))
    loss_tm, pred_tm = pl.pallas_call(
        kernel, out_shape=out_shapes,
        in_specs=[_VMEM] * len(args), out_specs=(_VMEM, _VMEM),
    )(*args)
    return loss_tm.T, pred_tm.T        # back to (B,T)


# ---------------------------------------------------------------------------
# Full forward (teacher forcing path; loss_fn = CrossEntropy(reduction='none'))
# ---------------------------------------------------------------------------
def seq2seq_atten_forward(params, enc_texts, enc_masks, dec_texts, dec_masks):
    H = params["hidden_size"]

    # encode()
    emb = jnp.take(params["enc_emb"], enc_texts, axis=0)              # (B,S,E)
    # TODO(synk): pack_padded_sequence variable-length semantics not modeled;
    #             enc_masks are all ones here so packing is the identity.
    enc_output, h_n, c_n = encoder_pallas(emb, params, H)

    # decode_init(): exact (scrambled) permute(2,0,1).reshape(-1,2H) of the module
    ench = jnp.transpose(h_n, (2, 0, 1)).reshape(-1, 2 * H)           # (B,2H)
    encc = jnp.transpose(c_n, (2, 0, 1)).reshape(-1, 2 * H)
    dec_h0 = jax.nn.relu(ench @ params["w_ench"].T + params["b_ench"])
    dec_c0 = jax.nn.relu(encc @ params["w_encc"].T + params["b_encc"])

    # teacher-forced decoder (random.random() > 0.0 is always True)
    dec_emb = jnp.take(params["dec_emb"], dec_texts[:, :-1], axis=0)   # (B,T,E)
    dec_tgt_tm = dec_texts[:, 1:].astype(jnp.int32).T                  # (T,B)
    dec_mask_tm = dec_masks[:, 1:].T                                   # (T,B)

    loss_steps, predict = decoder_pallas(
        enc_output, enc_masks, dec_emb, dec_tgt_tm, dec_mask_tm,
        dec_h0, dec_c0, params, H)

    loss = jnp.mean(jnp.sum(loss_steps, axis=1) / jnp.sum(dec_masks, axis=1))
    return loss, predict


# ---------------------------------------------------------------------------
if __name__ == "__main__":
    B, S_enc, T_dec = 2, 8, 8
    E, H = 32, 32
    V_enc, V_dec = 50, 40

    std, mag = 1e-4, 0.02
    key = jax.random.PRNGKey(0)
    ks = jax.random.split(key, 24)

    def normal(k, shape):
        return std * jax.random.normal(k, shape, jnp.float32)

    def unif(k, shape):
        return jax.random.uniform(k, shape, jnp.float32, -mag, mag)

    def lstm_bias():
        b = jnp.zeros((4 * H,), jnp.float32)
        return b.at[H:2 * H].set(1.0)       # forget-gate bias = 1 (init_lstm_wt)

    params = dict(
        hidden_size=H, vocab_size_dec=V_dec,
        enc_emb=normal(ks[0], (V_enc, E)),
        dec_emb=normal(ks[1], (V_dec, E)),
        # encoder bidirectional LSTM (PyTorch layout (4H, in))
        wih_f=unif(ks[2], (4 * H, E)), whh_f=unif(ks[3], (4 * H, H)),
        wih_r=unif(ks[4], (4 * H, E)), whh_r=unif(ks[5], (4 * H, H)),
        b_f=lstm_bias() + lstm_bias(),       # b_ih + b_hh
        b_r=lstm_bias() + lstm_bias(),
        # decoder LSTM (original init_linear_wt(dec_LSTM) is buggy; use small normal)
        wih_d=normal(ks[6], (4 * H, E)), whh_d=normal(ks[7], (4 * H, H)),
        b_d=jnp.zeros((4 * H,), jnp.float32),
        # linears, stored in PyTorch (out, in) layout
        w_dec_input=normal(ks[8], (E, E + 2 * H)), b_dec_input=normal(ks[9], (E,)),
        w_ench=normal(ks[10], (H, 2 * H)), b_ench=normal(ks[11], (H,)),
        w_encc=normal(ks[12], (H, 2 * H)), b_encc=normal(ks[13], (H,)),
        w_dfeat=normal(ks[14], (2 * H, 2 * H)), b_dfeat=normal(ks[15], (2 * H,)),
        w_eout=normal(ks[16], (2 * H, 2 * H)), b_eout=normal(ks[17], (2 * H,)),
        w_dout=normal(ks[18], (V_dec, 3 * H)), b_dout=normal(ks[19], (V_dec,)),
        # all_feature_fc is unused for attention='dot'
    )

    enc_texts = jax.random.randint(ks[20], (B, S_enc), 0, V_enc, dtype=jnp.int32)
    dec_texts = jax.random.randint(ks[21], (B, T_dec), 0, V_dec, dtype=jnp.int32)
    enc_masks = jnp.ones((B, S_enc), jnp.float32)   # all-valid lengths
    dec_masks = jnp.ones((B, T_dec), jnp.float32)

    loss, predict = seq2seq_atten_forward(params, enc_texts, enc_masks,
                                          dec_texts, dec_masks)
    jax.block_until_ready((loss, predict))
    assert predict.shape == (B, T_dec - 1)
    assert jnp.isfinite(loss)
    print("KERNEL_OK")
</pallas_src>

<mosaic_0001>
module attributes {stable_mosaic.version = 11 : i64} {
  func.func @enc_bilstm_kernel(%arg0: memref<8x2x256xf32, #tpu.memory_space<vmem>>, %arg1: memref<64x256xbf16, #tpu.memory_space<vmem>>, %arg2: memref<8x2x64xf32, #tpu.memory_space<vmem>>, %arg3: memref<2x64xf32, #tpu.memory_space<vmem>>, %arg4: memref<2x64xf32, #tpu.memory_space<vmem>>) attributes {dimension_semantics = [], scalar_prefetch = 0 : i64, scratch_operands = 0 : i64, tpu.core_type = #tpu.core_type<tc>} {
    %c0 = arith.constant 0 : index
    %c0_0 = arith.constant 0 : index
    %0 = vector.load %arg1[%c0, %c0_0] : memref<64x256xbf16, #tpu.memory_space<vmem>>, vector<64x256xbf16>
    %cst = arith.constant 0.000000e+00 : f32
    %1 = vector.broadcast %cst : f32 to vector<2x64xf32>
    %cst_1 = arith.constant 0.000000e+00 : f32
    %2 = vector.broadcast %cst_1 : f32 to vector<2x64xf32>
    %3 = arith.truncf %1 : vector<2x64xf32> to vector<2x64xbf16>
    %c0_2 = arith.constant 0 : index
    %c0_3 = arith.constant 0 : index
    %c0_4 = arith.constant 0 : index
    %4 = vector.load %arg0[%c0_2, %c0_3, %c0_4] : memref<8x2x256xf32, #tpu.memory_space<vmem>>, vector<1x2x256xf32>
    %5 = vector.shape_cast %4 : vector<1x2x256xf32> to vector<2x256xf32>
    %cst_5 = arith.constant dense<0.000000e+00> : vector<2x256xf32>
    %6 = tpu.matmul %3, %0, %cst_5 {dimension_numbers = #tpu.dot_dimension_numbers<[1], [0], [0], [1], [0, 0, 1, 1], [], []>} : vector<2x64xbf16>, vector<64x256xbf16>, vector<2x256xf32> -> vector<2x256xf32>
    %7 = arith.addf %5, %6 : vector<2x256xf32>
    %8 = vector.extract_strided_slice %7 {offsets = [0, 0], sizes = [2, 64], strides = [1, 1]} : vector<2x256xf32> to vector<2x64xf32>
    %9 = arith.negf %8 : vector<2x64xf32>
    %10 = math.exp %9 : vector<2x64xf32>
    %cst_6 = arith.constant 1.000000e+00 : f32
    %11 = vector.broadcast %cst_6 : f32 to vector<2x64xf32>
    %12 = arith.addf %11, %10 : vector<2x64xf32>
    %13 = arith.divf %11, %12 : vector<2x64xf32>
    %14 = vector.extract_strided_slice %7 {offsets = [0, 64], sizes = [2, 64], strides = [1, 1]} : vector<2x256xf32> to vector<2x64xf32>
    %15 = arith.negf %14 : vector<2x64xf32>
    %16 = math.exp %15 : vector<2x64xf32>
    %cst_7 = arith.constant 1.000000e+00 : f32
    %17 = vector.broadcast %cst_7 : f32 to vector<2x64xf32>
    %18 = arith.addf %17, %16 : vector<2x64xf32>
    %19 = arith.divf %17, %18 : vector<2x64xf32>
    %20 = vector.extract_strided_slice %7 {offsets = [0, 128], sizes = [2, 64], strides = [1, 1]} : vector<2x256xf32> to vector<2x64xf32>
    %21 = math.tanh %20 : vector<2x64xf32>
    %22 = vector.extract_strided_slice %7 {offsets = [0, 192], sizes = [2, 64], strides = [1, 1]} : vector<2x256xf32> to vector<2x64xf32>
    %23 = arith.negf %22 : vector<2x64xf32>
    %24 = math.exp %23 : vector<2x64xf32>
    %cst_8 = arith.constant 1.000000e+00 : f32
    %25 = vector.broadcast %cst_8 : f32 to vector<2x64xf32>
    %26 = arith.addf %25, %24 : vector<2x64xf32>
    %27 = arith.divf %25, %26 : vector<2x64xf32>
    %28 = arith.mulf %19, %2 : vector<2x64xf32>
    %29 = arith.mulf %13, %21 : vector<2x64xf32>
    %30 = arith.addf %28, %29 : vector<2x64xf32>
    %31 = math.tanh %30 : vector<2x64xf32>
    %32 = arith.mulf %27, %31 : vector<2x64xf32>
    %33 = arith.truncf %32 : vector<2x64xf32> to vector<2x64xbf16>
    %c0_9 = arith.constant 0 : index
    %c0_10 = arith.constant 0 : index
    %c0_11 = arith.constant 0 : index
    %34 = vector.load %arg2[%c0_9, %c0_10, %c0_11] : memref<8x2x64xf32, #tpu.memory_space<vmem>>, vector<1x2x64xf32>
    %35 = vector.shape_cast %34 : vector<1x2x64xf32> to vector<2x64xf32>
    %36 = vector.shape_cast %32 : vector<2x64xf32> to vector<1x2x64xf32>
    tpu.vector_store %arg2[%c0_9, %c0_10, %c0_11], %36 {strides = array<i32>} : memref<8x2x64xf32, #tpu.memory_space<vmem>>, vector<1x2x64xf32>,
    %c1 = arith.constant 1 : index
    %c0_12 = arith.constant 0 : index
    %c0_13 = arith.constant 0 : index
    %37 = vector.load %arg0[%c1, %c0_12, %c0_13] : memref<8x2x256xf32, #tpu.memory_space<vmem>>, vector<1x2x256xf32>
    %38 = vector.shape_cast %37 : vector<1x2x256xf32> to vector<2x256xf32>
    %cst_14 = arith.constant dense<0.000000e+00> : vector<2x256xf32>
    %39 = tpu.matmul %33, %0, %cst_14 {dimension_numbers = #tpu.dot_dimension_numbers<[1], [0], [0], [1], [0, 0, 1, 1], [], []>} : vector<2x64xbf16>, vector<64x256xbf16>, vector<2x256xf32> -> vector<2x256xf32>
    %40 = arith.addf %38, %39 : vector<2x256xf32>
    %41 = vector.extract_strided_slice %40 {offsets = [0, 0], sizes = [2, 64], strides = [1, 1]} : vector<2x256xf32> to vector<2x64xf32>
    %42 = arith.negf %41 : vector<2x64xf32>
    %43 = math.exp %42 : vector<2x64xf32>
    %cst_15 = arith.constant 1.000000e+00 : f32
    %44 = vector.broadcast %cst_15 : f32 to vector<2x64xf32>
    %45 = arith.addf %44, %43 : vector<2x64xf32>
    %46 = arith.divf %44, %45 : vector<2x64xf32>
    %47 = vector.extract_strided_slice %40 {offsets = [0, 64], sizes = [2, 64], strides = [1, 1]} : vector<2x256xf32> to vector<2x64xf32>
    %48 = arith.negf %47 : vector<2x64xf32>
    %49 = math.exp %48 : vector<2x64xf32>
    %cst_16 = arith.constant 1.000000e+00 : f32
    %50 = vector.broadcast %cst_16 : f32 to vector<2x64xf32>
    %51 = arith.addf %50, %49 : vector<2x64xf32>
    %52 = arith.divf %50, %51 : vector<2x64xf32>
    %53 = vector.extract_strided_slice %40 {offsets = [0, 128], sizes = [2, 64], strides = [1, 1]} : vector<2x256xf32> to vector<2x64xf32>
    %54 = math.tanh %53 : vector<2x64xf32>
    %55 = vector.extract_strided_slice %40 {offsets = [0, 192], sizes = [2, 64], strides = [1, 1]} : vector<2x256xf32> to vector<2x64xf32>
    %56 = arith.negf %55 : vector<2x64xf32>
    %57 = math.exp %56 : vector<2x64xf32>
    %cst_17 = arith.constant 1.000000e+00 : f32
    %58 = vector.broadcast %cst_17 : f32 to vector<2x64xf32>
    %59 = arith.addf %58, %57 : vector<2x64xf32>
    %60 = arith.divf %58, %59 : vector<2x64xf32>
    %61 = arith.mulf %52, %30 : vector<2x64xf32>
    %62 = arith.mulf %46, %54 : vector<2x64xf32>
    %63 = arith.addf %61, %62 : vector<2x64xf32>
    %64 = math.tanh %63 : vector<2x64xf32>
    %65 = arith.mulf %60, %64 : vector<2x64xf32>
    %66 = arith.truncf %65 : vector<2x64xf32> to vector<2x64xbf16>
    %c1_18 = arith.constant 1 : index
    %c0_19 = arith.constant 0 : index
    %c0_20 = arith.constant 0 : index
    %67 = vector.load %arg2[%c1_18, %c0_19, %c0_20] : memref<8x2x64xf32, #tpu.memory_space<vmem>>, vector<1x2x64xf32>
    %68 = vector.shape_cast %67 : vector<1x2x64xf32> to vector<2x64xf32>
    %69 = vector.shape_cast %65 : vector<2x64xf32> to vector<1x2x64xf32>
    tpu.vector_store %arg2[%c1_18, %c0_19, %c0_20], %69 {strides = array<i32>} : memref<8x2x64xf32, #tpu.memory_space<vmem>>, vector<1x2x64xf32>,
    %c2 = arith.constant 2 : index
    %c0_21 = arith.constant 0 : index
    %c0_22 = arith.constant 0 : index
    %70 = vector.load %arg0[%c2, %c0_21, %c0_22] : memref<8x2x256xf32, #tpu.memory_space<vmem>>, vector<1x2x256xf32>
    %71 = vector.shape_cast %70 : vector<1x2x256xf32> to vector<2x256xf32>
    %cst_23 = arith.constant dense<0.000000e+00> : vector<2x256xf32>
    %72 = tpu.matmul %66, %0, %cst_23 {dimension_numbers = #tpu.dot_dimension_numbers<[1], [0], [0], [1], [0, 0, 1, 1], [], []>} : vector<2x64xbf16>, vector<64x256xbf16>, vector<2x256xf32> -> vector<2x256xf32>
    %73 = arith.addf %71, %72 : vector<2x256xf32>
    %74 = vector.extract_strided_slice %73 {offsets = [0, 0], sizes = [2, 64], strides = [1, 1]} : vector<2x256xf32> to vector<2x64xf32>
    %75 = arith.negf %74 : vector<2x64xf32>
    %76 = math.exp %75 : vector<2x64xf32>
    %cst_24 = arith.constant 1.000000e+00 : f32
    %77 = vector.broadcast %cst_24 : f32 to vector<2x64xf32>
    %78 = arith.addf %77, %76 : vector<2x64xf32>
    %79 = arith.divf %77, %78 : vector<2x64xf32>
    %80 = vector.extract_strided_slice %73 {offsets = [0, 64], sizes = [2, 64], strides = [1, 1]} : vector<2x256xf32> to vector<2x64xf32>
    %81 = arith.negf %80 : vector<2x64xf32>
    %82 = math.exp %81 : vector<2x64xf32>
    %cst_25 = arith.constant 1.000000e+00 : f32
    %83 = vector.broadcast %cst_25 : f32 to vector<2x64xf32>
    %84 = arith.addf %83, %82 : vector<2x64xf32>
    %85 = arith.divf %83, %84 : vector<2x64xf32>
    %86 = vector.extract_strided_slice %73 {offsets = [0, 128], sizes = [2, 64], strides = [1, 1]} : vector<2x256xf32> to vector<2x64xf32>
    %87 = math.tanh %86 : vector<2x64xf32>
    %88 = vector.extract_strided_slice %73 {offsets = [0, 192], sizes = [2, 64], strides = [1, 1]} : vector<2x256xf32> to vector<2x64xf32>
    %89 = arith.negf %88 : vector<2x64xf32>
    %90 = math.exp %89 : vector<2x64xf32>
    %cst_26 = arith.constant 1.000000e+00 : f32
    %91 = vector.broadcast %cst_26 : f32 to vector<2x64xf32>
    %92 = arith.addf %91, %90 : vector<2x64xf32>
    %93 = arith.divf %91, %92 : vector<2x64xf32>
    %94 = arith.mulf %85, %63 : vector<2x64xf32>
    %95 = arith.mulf %79, %87 : vector<2x64xf32>
    %96 = arith.addf %94, %95 : vector<2x64xf32>
    %97 = math.tanh %96 : vector<2x64xf32>
    %98 = arith.mulf %93, %97 : vector<2x64xf32>
    %99 = arith.truncf %98 : vector<2x64xf32> to vector<2x64xbf16>
    %c2_27 = arith.constant 2 : index
    %c0_28 = arith.constant 0 : index
    %c0_29 = arith.constant 0 : index
    %100 = vector.load %arg2[%c2_27, %c0_28, %c0_29] : memref<8x2x64xf32, #tpu.memory_space<vmem>>, vector<1x2x64xf32>
    %101 = vector.shape_cast %100 : vector<1x2x64xf32> to vector<2x64xf32>
    %102 = vector.shape_cast %98 : vector<2x64xf32> to vector<1x2x64xf32>
    tpu.vector_store %arg2[%c2_27, %c0_28, %c0_29], %102 {strides = array<i32>} : memref<8x2x64xf32, #tpu.memory_space<vmem>>, vector<1x2x64xf32>,
    %c3 = arith.constant 3 : index
    %c0_30 = arith.constant 0 : index
    %c0_31 = arith.constant 0 : index
    %103 = vector.load %arg0[%c3, %c0_30, %c0_31] : memref<8x2x256xf32, #tpu.memory_space<vmem>>, vector<1x2x256xf32>
    %104 = vector.shape_cast %103 : vector<1x2x256xf32> to vector<2x256xf32>
    %cst_32 = arith.constant dense<0.000000e+00> : vector<2x256xf32>
    %105 = tpu.matmul %99, %0, %cst_32 {dimension_numbers = #tpu.dot_dimension_numbers<[1], [0], [0], [1], [0, 0, 1, 1], [], []>} : vector<2x64xbf16>, vector<64x256xbf16>, vector<2x256xf32> -> vector<2x256xf32>
    %106 = arith.addf %104, %105 : vector<2x256xf32>
    %107 = vector.extract_strided_slice %106 {offsets = [0, 0], sizes = [2, 64], strides = [1, 1]} : vector<2x256xf32> to vector<2x64xf32>
    %108 = arith.negf %107 : vector<2x64xf32>
    %109 = math.exp %108 : vector<2x64xf32>
    %cst_33 = arith.constant 1.000000e+00 : f32
    %110 = vector.broadcast %cst_33 : f32 to vector<2x64xf32>
    %111 = arith.addf %110, %109 : vector<2x64xf32>
    %112 = arith.divf %110, %111 : vector<2x64xf32>
    %113 = vector.extract_strided_slice %106 {offsets = [0, 64], sizes = [2, 64], strides = [1, 1]} : vector<2x256xf32> to vector<2x64xf32>
    %114 = arith.negf %113 : vector<2x64xf32>
    %115 = math.exp %114 : vector<2x64xf32>
    %cst_34 = arith.constant 1.000000e+00 : f32
    %116 = vector.broadcast %cst_34 : f32 to vector<2x64xf32>
    %117 = arith.addf %116, %115 : vector<2x64xf32>
    %118 = arith.divf %116, %117 : vector<2x64xf32>
    %119 = vector.extract_strided_slice %106 {offsets = [0, 128], sizes = [2, 64], strides = [1, 1]} : vector<2x256xf32> to vector<2x64xf32>
    %120 = math.tanh %119 : vector<2x64xf32>
    %121 = vector.extract_strided_slice %106 {offsets = [0, 192], sizes = [2, 64], strides = [1, 1]} : vector<2x256xf32> to vector<2x64xf32>
    %122 = arith.negf %121 : vector<2x64xf32>
    %123 = math.exp %122 : vector<2x64xf32>
    %cst_35 = arith.constant 1.000000e+00 : f32
    %124 = vector.broadcast %cst_35 : f32 to vector<2x64xf32>
    %125 = arith.addf %124, %123 : vector<2x64xf32>
    %126 = arith.divf %124, %125 : vector<2x64xf32>
    %127 = arith.mulf %118, %96 : vector<2x64xf32>
    %128 = arith.mulf %112, %120 : vector<2x64xf32>
    %129 = arith.addf %127, %128 : vector<2x64xf32>
    %130 = math.tanh %129 : vector<2x64xf32>
    %131 = arith.mulf %126, %130 : vector<2x64xf32>
    %132 = arith.truncf %131 : vector<2x64xf32> to vector<2x64xbf16>
    %c3_36 = arith.constant 3 : index
    %c0_37 = arith.constant 0 : index
    %c0_38 = arith.constant 0 : index
    %133 = vector.load %arg2[%c3_36, %c0_37, %c0_38] : memref<8x2x64xf32, #tpu.memory_space<vmem>>, vector<1x2x64xf32>
    %134 = vector.shape_cast %133 : vector<1x2x64xf32> to vector<2x64xf32>
    %135 = vector.shape_cast %131 : vector<2x64xf32> to vector<1x2x64xf32>
    tpu.vector_store %arg2[%c3_36, %c0_37, %c0_38], %135 {strides = array<i32>} : memref<8x2x64xf32, #tpu.memory_space<vmem>>, vector<1x2x64xf32>,
    %c4 = arith.constant 4 : index
    %c0_39 = arith.constant 0 : index
    %c0_40 = arith.constant 0 : index
    %136 = vector.load %arg0[%c4, %c0_39, %c0_40] : memref<8x2x256xf32, #tpu.memory_space<vmem>>, vector<1x2x256xf32>
    %137 = vector.shape_cast %136 : vector<1x2x256xf32> to vector<2x256xf32>
    %cst_41 = arith.constant dense<0.000000e+00> : vector<2x256xf32>
    %138 = tpu.matmul %132, %0, %cst_41 {dimension_numbers = #tpu.dot_dimension_numbers<[1], [0], [0], [1], [0, 0, 1, 1], [], []>} : vector<2x64xbf16>, vector<64x256xbf16>, vector<2x256xf32> -> vector<2x256xf32>
    %139 = arith.addf %137, %138 : vector<2x256xf32>
    %140 = vector.extract_strided_slice %139 {offsets = [0, 0], sizes = [2, 64], strides = [1, 1]} : vector<2x256xf32> to vector<2x64xf32>
    %141 = arith.negf %140 : vector<2x64xf32>
    %142 = math.exp %141 : vector<2x64xf32>
    %cst_42 = arith.constant 1.000000e+00 : f32
    %143 = vector.broadcast %cst_42 : f32 to vector<2x64xf32>
    %144 = arith.addf %143, %142 : vector<2x64xf32>
    %145 = arith.divf %143, %144 : vector<2x64xf32>
    %146 = vector.extract_strided_slice %139 {offsets = [0, 64], sizes = [2, 64], strides = [1, 1]} : vector<2x256xf32> to vector<2x64xf32>
    %147 = arith.negf %146 : vector<2x64xf32>
    %148 = math.exp %147 : vector<2x64xf32>
    %cst_43 = arith.constant 1.000000e+00 : f32
    %149 = vector.broadcast %cst_43 : f32 to vector<2x64xf32>
    %150 = arith.addf %149, %148 : vector<2x64xf32>
    %151 = arith.divf %149, %150 : vector<2x64xf32>
    %152 = vector.extract_strided_slice %139 {offsets = [0, 128], sizes = [2, 64], strides = [1, 1]} : vector<2x256xf32> to vector<2x64xf32>
    %153 = math.tanh %152 : vector<2x64xf32>
    %154 = vector.extract_strided_slice %139 {offsets = [0, 192], sizes = [2, 64], strides = [1, 1]} : vector<2x256xf32> to vector<2x64xf32>
    %155 = arith.negf %154 : vector<2x64xf32>
    %156 = math.exp %155 : vector<2x64xf32>
    %cst_44 = arith.constant 1.000000e+00 : f32
    %157 = vector.broadcast %cst_44 : f32 to vector<2x64xf32>
    %158 = arith.addf %157, %156 : vector<2x64xf32>
    %159 = arith.divf %157, %158 : vector<2x64xf32>
    %160 = arith.mulf %151, %129 : vector<2x64xf32>
    %161 = arith.mulf %145, %153 : vector<2x64xf32>
    %162 = arith.addf %160, %161 : vector<2x64xf32>
    %163 = math.tanh %162 : vector<2x64xf32>
    %164 = arith.mulf %159, %163 : vector<2x64xf32>
    %165 = arith.truncf %164 : vector<2x64xf32> to vector<2x64xbf16>
    %c4_45 = arith.constant 4 : index
    %c0_46 = arith.constant 0 : index
    %c0_47 = arith.constant 0 : index
    %166 = vector.load %arg2[%c4_45, %c0_46, %c0_47] : memref<8x2x64xf32, #tpu.memory_space<vmem>>, vector<1x2x64xf32>
    %167 = vector.shape_cast %166 : vector<1x2x64xf32> to vector<2x64xf32>
    %168 = vector.shape_cast %164 : vector<2x64xf32> to vector<1x2x64xf32>
    tpu.vector_store %arg2[%c4_45, %c0_46, %c0_47], %168 {strides = array<i32>} : memref<8x2x64xf32, #tpu.memory_space<vmem>>, vector<1x2x64xf32>,
    %c5 = arith.constant 5 : index
    %c0_48 = arith.constant 0 : index
    %c0_49 = arith.constant 0 : index
    %169 = vector.load %arg0[%c5, %c0_48, %c0_49] : memref<8x2x256xf32, #tpu.memory_space<vmem>>, vector<1x2x256xf32>
    %170 = vector.shape_cast %169 : vector<1x2x256xf32> to vector<2x256xf32>
    %cst_50 = arith.constant dense<0.000000e+00> : vector<2x256xf32>
    %171 = tpu.matmul %165, %0, %cst_50 {dimension_numbers = #tpu.dot_dimension_numbers<[1], [0], [0], [1], [0, 0, 1, 1], [], []>} : vector<2x64xbf16>, vector<64x256xbf16>, vector<2x256xf32> -> vector<2x256xf32>
    %172 = arith.addf %170, %171 : vector<2x256xf32>
    %173 = vector.extract_strided_slice %172 {offsets = [0, 0], sizes = [2, 64], strides = [1, 1]} : vector<2x256xf32> to vector<2x64xf32>
    %174 = arith.negf %173 : vector<2x64xf32>
    %175 = math.exp %174 : vector<2x64xf32>
    %cst_51 = arith.constant 1.000000e+00 : f32
    %176 = vector.broadcast %cst_51 : f32 to vector<2x64xf32>
    %177 = arith.addf %176, %175 : vector<2x64xf32>
    %178 = arith.divf %176, %177 : vector<2x64xf32>
    %179 = vector.extract_strided_slice %172 {offsets = [0, 64], sizes = [2, 64], strides = [1, 1]} : vector<2x256xf32> to vector<2x64xf32>
    %180 = arith.negf %179 : vector<2x64xf32>
    %181 = math.exp %180 : vector<2x64xf32>
    %cst_52 = arith.constant 1.000000e+00 : f32
    %182 = vector.broadcast %cst_52 : f32 to vector<2x64xf32>
    %183 = arith.addf %182, %181 : vector<2x64xf32>
    %184 = arith.divf %182, %183 : vector<2x64xf32>
    %185 = vector.extract_strided_slice %172 {offsets = [0, 128], sizes = [2, 64], strides = [1, 1]} : vector<2x256xf32> to vector<2x64xf32>
    %186 = math.tanh %185 : vector<2x64xf32>
    %187 = vector.extract_strided_slice %172 {offsets = [0, 192], sizes = [2, 64], strides = [1, 1]} : vector<2x256xf32> to vector<2x64xf32>
    %188 = arith.negf %187 : vector<2x64xf32>
    %189 = math.exp %188 : vector<2x64xf32>
    %cst_53 = arith.constant 1.000000e+00 : f32
    %190 = vector.broadcast %cst_53 : f32 to vector<2x64xf32>
    %191 = arith.addf %190, %189 : vector<2x64xf32>
    %192 = arith.divf %190, %191 : vector<2x64xf32>
    %193 = arith.mulf %184, %162 : vector<2x64xf32>
    %194 = arith.mulf %178, %186 : vector<2x64xf32>
    %195 = arith.addf %193, %194 : vector<2x64xf32>
    %196 = math.tanh %195 : vector<2x64xf32>
    %197 = arith.mulf %192, %196 : vector<2x64xf32>
    %198 = arith.truncf %197 : vector<2x64xf32> to vector<2x64xbf16>
    %c5_54 = arith.constant 5 : index
    %c0_55 = arith.constant 0 : index
    %c0_56 = arith.constant 0 : index
    %199 = vector.load %arg2[%c5_54, %c0_55, %c0_56] : memref<8x2x64xf32, #tpu.memory_space<vmem>>, vector<1x2x64xf32>
    %200 = vector.shape_cast %199 : vector<1x2x64xf32> to vector<2x64xf32>
    %201 = vector.shape_cast %197 : vector<2x64xf32> to vector<1x2x64xf32>
    tpu.vector_store %arg2[%c5_54, %c0_55, %c0_56], %201 {strides = array<i32>} : memref<8x2x64xf32, #tpu.memory_space<vmem>>, vector<1x2x64xf32>,
    %c6 = arith.constant 6 : index
    %c0_57 = arith.constant 0 : index
    %c0_58 = arith.constant 0 : index
    %202 = vector.load %arg0[%c6, %c0_57, %c0_58] : memref<8x2x256xf32, #tpu.memory_space<vmem>>, vector<1x2x256xf32>
    %203 = vector.shape_cast %202 : vector<1x2x256xf32> to vector<2x256xf32>
    %cst_59 = arith.constant dense<0.000000e+00> : vector<2x256xf32>
    %204 = tpu.matmul %198, %0, %cst_59 {dimension_numbers = #tpu.dot_dimension_numbers<[1], [0], [0], [1], [0, 0, 1, 1], [], []>} : vector<2x64xbf16>, vector<64x256xbf16>, vector<2x256xf32> -> vector<2x256xf32>
    %205 = arith.addf %203, %204 : vector<2x256xf32>
    %206 = vector.extract_strided_slice %205 {offsets = [0, 0], sizes = [2, 64], strides = [1, 1]} : vector<2x256xf32> to vector<2x64xf32>
    %207 = arith.negf %206 : vector<2x64xf32>
    %208 = math.exp %207 : vector<2x64xf32>
    %cst_60 = arith.constant 1.000000e+00 : f32
    %209 = vector.broadcast %cst_60 : f32 to vector<2x64xf32>
    %210 = arith.addf %209, %208 : vector<2x64xf32>
    %211 = arith.divf %209, %210 : vector<2x64xf32>
    %212 = vector.extract_strided_slice %205 {offsets = [0, 64], sizes = [2, 64], strides = [1, 1]} : vector<2x256xf32> to vector<2x64xf32>
    %213 = arith.negf %212 : vector<2x64xf32>
    %214 = math.exp %213 : vector<2x64xf32>
    %cst_61 = arith.constant 1.000000e+00 : f32
    %215 = vector.broadcast %cst_61 : f32 to vector<2x64xf32>
    %216 = arith.addf %215, %214 : vector<2x64xf32>
    %217 = arith.divf %215, %216 : vector<2x64xf32>
    %218 = vector.extract_strided_slice %205 {offsets = [0, 128], sizes = [2, 64], strides = [1, 1]} : vector<2x256xf32> to vector<2x64xf32>
    %219 = math.tanh %218 : vector<2x64xf32>
    %220 = vector.extract_strided_slice %205 {offsets = [0, 192], sizes = [2, 64], strides = [1, 1]} : vector<2x256xf32> to vector<2x64xf32>
    %221 = arith.negf %220 : vector<2x64xf32>
    %222 = math.exp %221 : vector<2x64xf32>
    %cst_62 = arith.constant 1.000000e+00 : f32
    %223 = vector.broadcast %cst_62 : f32 to vector<2x64xf32>
    %224 = arith.addf %223, %222 : vector<2x64xf32>
    %225 = arith.divf %223, %224 : vector<2x64xf32>
    %226 = arith.mulf %217, %195 : vector<2x64xf32>
    %227 = arith.mulf %211, %219 : vector<2x64xf32>
    %228 = arith.addf %226, %227 : vector<2x64xf32>
    %229 = math.tanh %228 : vector<2x64xf32>
    %230 = arith.mulf %225, %229 : vector<2x64xf32>
    %231 = arith.truncf %230 : vector<2x64xf32> to vector<2x64xbf16>
    %c6_63 = arith.constant 6 : index
    %c0_64 = arith.constant 0 : index
    %c0_65 = arith.constant 0 : index
    %232 = vector.load %arg2[%c6_63, %c0_64, %c0_65] : memref<8x2x64xf32, #tpu.memory_space<vmem>>, vector<1x2x64xf32>
    %233 = vector.shape_cast %232 : vector<1x2x64xf32> to vector<2x64xf32>
    %234 = vector.shape_cast %230 : vector<2x64xf32> to vector<1x2x64xf32>
    tpu.vector_store %arg2[%c6_63, %c0_64, %c0_65], %234 {strides = array<i32>} : memref<8x2x64xf32, #tpu.memory_space<vmem>>, vector<1x2x64xf32>,
    %c7 = arith.constant 7 : index
    %c0_66 = arith.constant 0 : index
    %c0_67 = arith.constant 0 : index
    %235 = vector.load %arg0[%c7, %c0_66, %c0_67] : memref<8x2x256xf32, #tpu.memory_space<vmem>>, vector<1x2x256xf32>
    %236 = vector.shape_cast %235 : vector<1x2x256xf32> to vector<2x256xf32>
    %cst_68 = arith.constant dense<0.000000e+00> : vector<2x256xf32>
    %237 = tpu.matmul %231, %0, %cst_68 {dimension_numbers = #tpu.dot_dimension_numbers<[1], [0], [0], [1], [0, 0, 1, 1], [], []>} : vector<2x64xbf16>, vector<64x256xbf16>, vector<2x256xf32> -> vector<2x256xf32>
    %238 = arith.addf %236, %237 : vector<2x256xf32>
    %239 = vector.extract_strided_slice %238 {offsets = [0, 0], sizes = [2, 64], strides = [1, 1]} : vector<2x256xf32> to vector<2x64xf32>
    %240 = arith.negf %239 : vector<2x64xf32>
    %241 = math.exp %240 : vector<2x64xf32>
    %cst_69 = arith.constant 1.000000e+00 : f32
    %242 = vector.broadcast %cst_69 : f32 to vector<2x64xf32>
    %243 = arith.addf %242, %241 : vector<2x64xf32>
    %244 = arith.divf %242, %243 : vector<2x64xf32>
    %245 = vector.extract_strided_slice %238 {offsets = [0, 64], sizes = [2, 64], strides = [1, 1]} : vector<2x256xf32> to vector<2x64xf32>
    %246 = arith.negf %245 : vector<2x64xf32>
    %247 = math.exp %246 : vector<2x64xf32>
    %cst_70 = arith.constant 1.000000e+00 : f32
    %248 = vector.broadcast %cst_70 : f32 to vector<2x64xf32>
    %249 = arith.addf %248, %247 : vector<2x64xf32>
    %250 = arith.divf %248, %249 : vector<2x64xf32>
    %251 = vector.extract_strided_slice %238 {offsets = [0, 128], sizes = [2, 64], strides = [1, 1]} : vector<2x256xf32> to vector<2x64xf32>
    %252 = math.tanh %251 : vector<2x64xf32>
    %253 = vector.extract_strided_slice %238 {offsets = [0, 192], sizes = [2, 64], strides = [1, 1]} : vector<2x256xf32> to vector<2x64xf32>
    %254 = arith.negf %253 : vector<2x64xf32>
    %255 = math.exp %254 : vector<2x64xf32>
    %cst_71 = arith.constant 1.000000e+00 : f32
    %256 = vector.broadcast %cst_71 : f32 to vector<2x64xf32>
    %257 = arith.addf %256, %255 : vector<2x64xf32>
    %258 = arith.divf %256, %257 : vector<2x64xf32>
    %259 = arith.mulf %250, %228 : vector<2x64xf32>
    %260 = arith.mulf %244, %252 : vector<2x64xf32>
    %261 = arith.addf %259, %260 : vector<2x64xf32>
    %262 = math.tanh %261 : vector<2x64xf32>
    %263 = arith.mulf %258, %262 : vector<2x64xf32>
    %c7_72 = arith.constant 7 : index
    %c0_73 = arith.constant 0 : index
    %c0_74 = arith.constant 0 : index
    %264 = vector.load %arg2[%c7_72, %c0_73, %c0_74] : memref<8x2x64xf32, #tpu.memory_space<vmem>>, vector<1x2x64xf32>
    %265 = vector.shape_cast %264 : vector<1x2x64xf32> to vector<2x64xf32>
    %266 = vector.shape_cast %263 : vector<2x64xf32> to vector<1x2x64xf32>
    tpu.vector_store %arg2[%c7_72, %c0_73, %c0_74], %266 {strides = array<i32>} : memref<8x2x64xf32, #tpu.memory_space<vmem>>, vector<1x2x64xf32>,
    %c0_75 = arith.constant 0 : index
    %c0_76 = arith.constant 0 : index
    %267 = vector.load %arg3[%c0_75, %c0_76] : memref<2x64xf32, #tpu.memory_space<vmem>>, vector<2x64xf32>
    tpu.vector_store %arg3[%c0_75, %c0_76], %263 {strides = array<i32>} : memref<2x64xf32, #tpu.memory_space<vmem>>, vector<2x64xf32>,
    %c0_77 = arith.constant 0 : index
    %c0_78 = arith.constant 0 : index
    %268 = vector.load %arg4[%c0_77, %c0_78] : memref<2x64xf32, #tpu.memory_space<vmem>>, vector<2x64xf32>
    tpu.vector_store %arg4[%c0_77, %c0_78], %261 {strides = array<i32>} : memref<2x64xf32, #tpu.memory_space<vmem>>, vector<2x64xf32>,
    return
  }
}

</mosaic_0001>

<llo_original>
// kernel: tpu_custom_call.1
$region0: #{tpu_custom_call.1}
  #allocation0 [shape = 'u32[]', space=smem, size = 0x4, offset = 0x4, fixed_abs, tag = 'smem constant byte address 0x4 - core index']
  #allocation1 [shape = 'u32[144,128]{1,0:T(1,128)}', space=vmem, size = 0x12000, scoped, tag = 'internal scratch']
  %s0 = inlined_call_operand.hbm [shape: f32[8,2,256], index: 0, kind: input, shape index: {}]
  %s1 = inlined_call_operand.hbm [shape: bf16[64,256], index: 1, kind: input, shape index: {}]
  %s2 = inlined_call_operand.hbm [shape: f32[8,2,64], index: 2, kind: output, shape index: {0}]
  %s3 = inlined_call_operand.hbm [shape: f32[2,64], index: 3, kind: output, shape index: {1}]
  %s4 = inlined_call_operand.hbm [shape: f32[2,64], index: 4, kind: output, shape index: {2}]
  %5 = xla_tuple %s2, %s3, %s4
  %s6 = sld [smem:[#allocation0]]
  $region42: #{tpu_custom_call.1} parent=0
    _
  %s8 = ssub.s32 1, %s6
  %s9 = scalar_select 0, %s8, %s6
  $region1: #{tpu_custom_call.1} parent=0
    #allocation2 [shape = 'u8[16384]{0}', space=vmem, size = 0x4000, scoped, tag = 'input window, operand 0, single buffered']
    #allocation3 [shape = 's32[1]{0}', space=sflag, size = 0x4, scoped, tag = 'scoped memory for tpu_custom_call.1']
    #allocation4 [shape = 's32[1]{0}', space=sflag, size = 0x4, scoped, tag = 'scoped memory for tpu_custom_call.1']
    #allocation5 [shape = 'u8[32768]{0}', space=vmem, size = 0x8000, scoped, tag = 'input window, operand 1, single buffered']
    #allocation6 [shape = 's32[1]{0}', space=sflag, size = 0x4, scoped, tag = 'scoped memory for tpu_custom_call.1']
    #allocation7 [shape = 'u8[8192]{0}', space=vmem, size = 0x2000, scoped, tag = 'output window, operand 0, single buffered']
    #allocation8 [shape = 'u8[1024]{0}', space=vmem, size = 0x400, scoped, tag = 'output window, operand 1, single buffered']
    #allocation9 [shape = 's32[1]{0}', space=sflag, size = 0x4, scoped, tag = 'scoped memory for tpu_custom_call.1']
    #allocation10 [shape = 'u8[1024]{0}', space=vmem, size = 0x400, scoped, tag = 'output window, operand 2, single buffered']
    %10 = vsyncpa [#allocation3], 0
    %11 = vsyncpa [#allocation6], 0
    %12 = vsyncpa [#allocation4], 0
    %13 = vsyncpa [#allocation9], 0
    // Predicated region
    $region2: #{tpu_custom_call.1} parent=1 // pred_check
      _
    $region3: #{tpu_custom_call.1} parent=1 // pred_check_branch
      %15 = sbr.rel (0) target = $region5
    $region4: #{tpu_custom_call.1} parent=1 // pred_region
      %s17 = ssub.s32 512, 512
      %18 = vsyncadd [#allocation3], %s17
      %s19 = sshll.u32 [#allocation2], 4
      %s20 = int_to_ptr.vmem [resolvable:$true] %s19
      %25 = dma.hbm_to_vmem [thread:$0]  %s0, 512, %s20, [#allocation3], 64, 64, 4
    $region5: #{tpu_custom_call.1} parent=1 // pred_fallthru
      _
    // Predicated region
    $region6: #{tpu_custom_call.1} parent=1 // pred_check
      _
    $region7: #{tpu_custom_call.1} parent=1 // pred_check_branch
      %27 = sbr.rel (0) target = $region9
    $region8: #{tpu_custom_call.1} parent=1 // pred_region
      %s29 = ssub.s32 1024, 1024
      %30 = vsyncadd [#allocation6], %s29
      %s31 = sshll.u32 [#allocation5], 4
      %s32 = int_to_ptr.vmem [resolvable:$true] %s31
      %37 = dma.hbm_to_vmem [thread:$0]  %s1, 1024, %s32, [#allocation6], 128, 128, 8
    $region9: #{tpu_custom_call.1} parent=1 // pred_fallthru
      _
    // Predicated region
    $region10: #{tpu_custom_call.1} parent=1 // pred_check
      _
    $region11: #{tpu_custom_call.1} parent=1 // pred_check_branch
      %39 = sbr.rel (0) target = $region13
    $region12: #{tpu_custom_call.1} parent=1 // pred_region
      %40 = dma.done [#allocation3], 512
    $region13: #{tpu_custom_call.1} parent=1 // pred_fallthru
      _
    // Predicated region
    $region14: #{tpu_custom_call.1} parent=1 // pred_check
      _
    $region15: #{tpu_custom_call.1} parent=1 // pred_check_branch
      %42 = sbr.rel (0) target = $region17
    $region16: #{tpu_custom_call.1} parent=1 // pred_region
      %43 = dma.done [#allocation6], 1024
    $region17: #{tpu_custom_call.1} parent=1 // pred_fallthru
      _
    %v45 = vld [vmem:[#allocation5] sm:$0xff]
    %v46 = vld [vmem:[#allocation5 + $0x8] sm:$0xff]
    %v47 = vld [vmem:[#allocation5 + $0x10] sm:$0xff]
    %v48 = vld [vmem:[#allocation5 + $0x18] sm:$0xff]
    %v49 = vld [vmem:[#allocation5 + $0x20] sm:$0xff]
    %v50 = vld [vmem:[#allocation5 + $0x28] sm:$0xff]
    %v51 = vld [vmem:[#allocation5 + $0x30] sm:$0xff]
    %v52 = vld [vmem:[#allocation5 + $0x38] sm:$0xff]
    %v53 = vld [vmem:[#allocation2] sm:$0xf]
    %v62 = vunpack.c.l.b16 %v45
    %v63 = vunpack.c.h.b16 %v45
    %v64 = vunpack.c.l.b16 %v46
    %v65 = vunpack.c.h.b16 %v46
    %v66 = vunpack.c.l.b16 %v47
    %v67 = vunpack.c.h.b16 %v47
    %v68 = vunpack.c.l.b16 %v48
    %v69 = vunpack.c.h.b16 %v48
    %v70 = vunpack.c.l.b16 %v49
    %v71 = vunpack.c.h.b16 %v49
    %v72 = vunpack.c.l.b16 %v50
    %v73 = vunpack.c.h.b16 %v50
    %v74 = vunpack.c.l.b16 %v51
    %v75 = vunpack.c.h.b16 %v51
    %v76 = vunpack.c.l.b16 %v52
    %v77 = vunpack.c.h.b16 %v52
    %v78 = vpack.c.b16 %v64, %v62
    %v79 = vpack.c.b16 %v65, %v63
    %v80 = vpack.c.b16 %v68, %v66
    %v81 = vpack.c.b16 %v69, %v67
    %v82 = vpack.c.b16 %v72, %v70
    %v83 = vpack.c.b16 %v73, %v71
    %v84 = vpack.c.b16 %v76, %v74
    %v85 = vpack.c.b16 %v77, %v75
    %vm94 = vcmask 523264
    %v96 = vsel %vm94, 0, 0
    %98 = vmatprep.subr.bf16.mxu0 %v79
    %99 = vmatpush1.bf16.msra.mxu0 %v78
    %100 = vmatprep.subr.bf16.mxu0 %v81
    %101 = vmatpush1.bf16.msra.mxu0 %v80
    %102 = vmatprep.subr.bf16.mxu0 %v83
    %103 = vmatpush1.bf16.msra.mxu0 %v82
    %104 = vmatprep.subr.bf16.mxu0 %v85
    %105 = vmatpush1.bf16.msra.mxu0 %v84
    %106 = vmatprep.subr.bf16.mxu0 0
    %107 = vmatpush1.bf16.msra.mxu0 0
    %108 = vmatprep.subr.bf16.mxu0 0
    %109 = vmatpush1.bf16.msra.mxu0 0
    %110 = vmatprep.subr.bf16.mxu0 0
    %111 = vmatpush1.bf16.msra.mxu0 0
    %112 = vmatprep.subr.bf16.mxu0 0
    %113 = vmatpush1.bf16.msra.mxu0 0
    %114 = vmatprep.subr.bf16.mxu0 0
    %115 = vmatpush1.bf16.msra.mxu0 0
    %116 = vmatprep.subr.bf16.mxu0 0
    %117 = vmatpush1.bf16.msra.mxu0 0
    %118 = vmatprep.subr.bf16.mxu0 0
    %119 = vmatpush1.bf16.msra.mxu0 0
    %120 = vmatprep.subr.bf16.mxu0 0
    %121 = vmatpush1.bf16.msra.mxu0 0
    %122 = vmatprep.subr.bf16.mxu0 0
    %123 = vmatpush1.bf16.msra.mxu0 0
    %124 = vmatprep.subr.bf16.mxu0 0
    %125 = vmatpush1.bf16.msra.mxu0 0
    %126 = vmatprep.subr.bf16.mxu0 0
    %127 = vmatpush1.bf16.msra.mxu0 0
    %128 = vmatprep.subr.bf16.mxu0 0
    %129 = vmatpush1.bf16.msra.mxu0 0
    %130 = vmatprep.mubr.bf16.mxu0 0
    %131 = vmatmul.mubr.bf16.gmra.mrb[0].mxu0 %v96
    %v132 = vpop.f32.mrb[0].mxu0
    %v133 = vadd.f32 0.0, %v132
    %v134 = vpop.f32.mrb[0].mxu0
    %v135 = vadd.f32 0.0, %v134
    %v136 = vpop.f32.mrb[0].mxu0
    %v137 = vpop.f32.mrb[0].mxu0
    %138 = vdwg.mxu0
    %v141 = vcombine.low %v133, %v135
    %v143 = vunpack.c.l.s4 1983009808
    %v144 = vunpack.c.0.s8 %v143
    %v145 = vlaneseq
    %v146 = vshrl.u32 %v145, 7
    %v147 = vsub.s32 %v144, %v146
    %v148 = vrot.slane %v141, %v147
    %v150 = vadd.f32 %v53, %v148
    %v151 = vxor.u32 %v150, 2147483648
    %v152 = vmul.f32 %v151, 1.442695
    %v153 = vpow.pop %v152
    %v154 = vadd.f32 %v153, 1.0
    %v155 = vrcp.pop %v154
    %v156 = vmul.f32 1.0, %v155
    %v158 = vrot.slane %v150, 2
    %v160 = vtanh.pop %v158
    %161 = vrot.lane.b32.xlu0 %v150, 64
    %v162 = vpop.permute.xlu0 %161
    %v163 = vrot.slane %v162, 2
    %v165 = vxor.u32 %v163, 2147483648
    %v166 = vmul.f32 %v165, 1.442695
    %v167 = vpow.pop %v166
    %v168 = vadd.f32 %v167, 1.0
    %v169 = vrcp.pop %v168
    %v170 = vmul.f32 1.0, %v169
    %v171 = vmul.f32 %v156, 0.0
    %v172 = vmul.f32 %v156, %v160
    %174 = vrot.lane.b32.xlu0 %v172, 64
    %v175 = vpop.permute.xlu0 %174
    %v177 = vadd.f32 %v171, %v175
    %v178 = vtanh.pop %v177
    %180 = vrot.lane.b32.xlu0 %v178, 64
    %v181 = vpop.permute.xlu0 %180
    %v183 = vmul.f32 %v170, %v181
    %v184 = vpack.c.bf16 %v183, %v183
    %vm185 = vcmask 517120
    %186 = vst.msk [vmem:[#allocation7] sm:$0x3] %vm185, %v183
    %s187 = scalar_lea.vmem [#allocation2], 4
    %v188 = vld [vmem:[%s187] sm:$0xf]
    %v190 = vsel %vm94, %v184, 0
    %192 = vmatprep.subr.bf16.mxu0 %v79
    %193 = vmatpush1.bf16.msra.mxu0 %v78
    %194 = vmatprep.subr.bf16.mxu0 %v81
    %195 = vmatpush1.bf16.msra.mxu0 %v80
    %196 = vmatprep.subr.bf16.mxu0 %v83
    %197 = vmatpush1.bf16.msra.mxu0 %v82
    %198 = vmatprep.subr.bf16.mxu0 %v85
    %199 = vmatpush1.bf16.msra.mxu0 %v84
    %200 = vmatprep.subr.bf16.mxu0 0
    %201 = vmatpush1.bf16.msra.mxu0 0
    %202 = vmatprep.subr.bf16.mxu0 0
    %203 = vmatpush1.bf16.msra.mxu0 0
    %204 = vmatprep.subr.bf16.mxu0 0
    %205 = vmatpush1.bf16.msra.mxu0 0
    %206 = vmatprep.subr.bf16.mxu0 0
    %207 = vmatpush1.bf16.msra.mxu0 0
    %208 = vmatprep.subr.bf16.mxu0 0
    %209 = vmatpush1.bf16.msra.mxu0 0
    %210 = vmatprep.subr.bf16.mxu0 0
    %211 = vmatpush1.bf16.msra.mxu0 0
    %212 = vmatprep.subr.bf16.mxu0 0
    %213 = vmatpush1.bf16.msra.mxu0 0
    %214 = vmatprep.subr.bf16.mxu0 0
    %215 = vmatpush1.bf16.msra.mxu0 0
    %216 = vmatprep.subr.bf16.mxu0 0
    %217 = vmatpush1.bf16.msra.mxu0 0
    %218 = vmatprep.subr.bf16.mxu0 0
    %219 = vmatpush1.bf16.msra.mxu0 0
    %220 = vmatprep.subr.bf16.mxu0 0
    %221 = vmatpush1.bf16.msra.mxu0 0
    %222 = vmatprep.subr.bf16.mxu0 0
    %223 = vmatpush1.bf16.msra.mxu0 0
    %224 = vmatprep.mubr.bf16.mxu0 0
    %225 = vmatmul.mubr.bf16.gmra.mrb[0].mxu0 %v190
    %v226 = vpop.f32.mrb[0].mxu0
    %v227 = vadd.f32 0.0, %v226
    %v228 = vpop.f32.mrb[0].mxu0
    %v229 = vadd.f32 0.0, %v228
    %v230 = vpop.f32.mrb[0].mxu0
    %v231 = vpop.f32.mrb[0].mxu0
    %232 = vdwg.mxu0
    %v235 = vcombine.low %v227, %v229
    %v237 = vunpack.c.l.s4 1983009808
    %v238 = vunpack.c.0.s8 %v237
    %v239 = vlaneseq
    %v240 = vshrl.u32 %v239, 7
    %v241 = vsub.s32 %v238, %v240
    %v242 = vrot.slane %v235, %v241
    %v244 = vadd.f32 %v188, %v242
    %v245 = vxor.u32 %v244, 2147483648
    %v246 = vmul.f32 %v245, 1.442695
    %v247 = vpow.pop %v246
    %v248 = vadd.f32 %v247, 1.0
    %v249 = vrcp.pop %v248
    %v250 = vmul.f32 1.0, %v249
    %v252 = vrot.slane %v244, 2
    %v254 = vtanh.pop %v252
    %255 = vrot.lane.b32.xlu0 %v244, 64
    %v256 = vpop.permute.xlu0 %255
    %v257 = vrot.slane %v256, 2
    %v259 = vxor.u32 %v257, 2147483648
    %v260 = vmul.f32 %v259, 1.442695
    %v261 = vpow.pop %v260
    %v262 = vadd.f32 %v261, 1.0
    %v263 = vrcp.pop %v262
    %v264 = vmul.f32 1.0, %v263
    %v265 = vmul.f32 %v250, %v177
    %v266 = vmul.f32 %v250, %v254
    %268 = vrot.lane.b32.xlu0 %v266, 64
    %v269 = vpop.permute.xlu0 %268
    %v271 = vadd.f32 %v265, %v269
    %v272 = vtanh.pop %v271
    %274 = vrot.lane.b32.xlu0 %v272, 64
    %v275 = vpop.permute.xlu0 %274
    %v277 = vmul.f32 %v264, %v275
    %v278 = vpack.c.bf16 %v277, %v277
    %s279 = scalar_lea.vmem [#allocation7], 2
    %280 = vst.msk [vmem:[%s279] sm:$0x3] %vm185, %v277
    %s281 = scalar_lea.vmem [#allocation2], 8
    %v282 = vld [vmem:[%s281] sm:$0xf]
    %v284 = vsel %vm94, %v278, 0
    %286 = vmatprep.subr.bf16.mxu0 %v79
    %287 = vmatpush1.bf16.msra.mxu0 %v78
    %288 = vmatprep.subr.bf16.mxu0 %v81
    %289 = vmatpush1.bf16.msra.mxu0 %v80
    %290 = vmatprep.subr.bf16.mxu0 %v83
    %291 = vmatpush1.bf16.msra.mxu0 %v82
    %292 = vmatprep.subr.bf16.mxu0 %v85
    %293 = vmatpush1.bf16.msra.mxu0 %v84
    %294 = vmatprep.subr.bf16.mxu0 0
    %295 = vmatpush1.bf16.msra.mxu0 0
    %296 = vmatprep.subr.bf16.mxu0 0
    %297 = vmatpush1.bf16.msra.mxu0 0
    %298 = vmatprep.subr.bf16.mxu0 0
    %299 = vmatpush1.bf16.msra.mxu0 0
    %300 = vmatprep.subr.bf16.mxu0 0
    %301 = vmatpush1.bf16.msra.mxu0 0
    %302 = vmatprep.subr.bf16.mxu0 0
    %303 = vmatpush1.bf16.msra.mxu0 0
    %304 = vmatprep.subr.bf16.mxu0 0
    %305 = vmatpush1.bf16.msra.mxu0 0
    %306 = vmatprep.subr.bf16.mxu0 0
    %307 = vmatpush1.bf16.msra.mxu0 0
    %308 = vmatprep.subr.bf16.mxu0 0
    %309 = vmatpush1.bf16.msra.mxu0 0
    %310 = vmatprep.subr.bf16.mxu0 0
    %311 = vmatpush1.bf16.msra.mxu0 0
    %312 = vmatprep.subr.bf16.mxu0 0
    %313 = vmatpush1.bf16.msra.mxu0 0
    %314 = vmatprep.subr.bf16.mxu0 0
    %315 = vmatpush1.bf16.msra.mxu0 0
    %316 = vmatprep.subr.bf16.mxu0 0
    %317 = vmatpush1.bf16.msra.mxu0 0
    %318 = vmatprep.mubr.bf16.mxu0 0
    %319 = vmatmul.mubr.bf16.gmra.mrb[0].mxu0 %v284
    %v320 = vpop.f32.mrb[0].mxu0
    %v321 = vadd.f32 0.0, %v320
    %v322 = vpop.f32.mrb[0].mxu0
    %v323 = vadd.f32 0.0, %v322
    %v324 = vpop.f32.mrb[0].mxu0
    %v325 = vpop.f32.mrb[0].mxu0
    %326 = vdwg.mxu0
    %v329 = vcombine.low %v321, %v323
    %v331 = vunpack.c.l.s4 1983009808
    %v332 = vunpack.c.0.s8 %v331
    %v333 = vlaneseq
    %v334 = vshrl.u32 %v333, 7
    %v335 = vsub.s32 %v332, %v334
    %v336 = vrot.slane %v329, %v335
    %v338 = vadd.f32 %v282, %v336
    %v339 = vxor.u32 %v338, 2147483648
    %v340 = vmul.f32 %v339, 1.442695
    %v341 = vpow.pop %v340
    %v342 = vadd.f32 %v341, 1.0
    %v343 = vrcp.pop %v342
    %v344 = vmul.f32 1.0, %v343
    %v346 = vrot.slane %v338, 2
    %v348 = vtanh.pop %v346
    %349 = vrot.lane.b32.xlu0 %v338, 64
    %v350 = vpop.permute.xlu0 %349
    %v351 = vrot.slane %v350, 2
    %v353 = vxor.u32 %v351, 2147483648
    %v354 = vmul.f32 %v353, 1.442695
    %v355 = vpow.pop %v354
    %v356 = vadd.f32 %v355, 1.0
    %v357 = vrcp.pop %v356
    %v358 = vmul.f32 1.0, %v357
    %v359 = vmul.f32 %v344, %v271
    %v360 = vmul.f32 %v344, %v348
    %362 = vrot.lane.b32.xlu0 %v360, 64
    %v363 = vpop.permute.xlu0 %362
    %v365 = vadd.f32 %v359, %v363
    %v366 = vtanh.pop %v365
    %368 = vrot.lane.b32.xlu0 %v366, 64
    %v369 = vpop.permute.xlu0 %368
    %v371 = vmul.f32 %v358, %v369
    %v372 = vpack.c.bf16 %v371, %v371
    %s373 = scalar_lea.vmem [#allocation7], 4
    %374 = vst.msk [vmem:[%s373] sm:$0x3] %vm185, %v371
    %s375 = scalar_lea.vmem [#allocation2], 12
    %v376 = vld [vmem:[%s375] sm:$0xf]
    %v378 = vsel %vm94, %v372, 0
    %380 = vmatprep.subr.bf16.mxu0 %v79
    %381 = vmatpush1.bf16.msra.mxu0 %v78
    %382 = vmatprep.subr.bf16.mxu0 %v81
    %383 = vmatpush1.bf16.msra.mxu0 %v80
    %384 = vmatprep.subr.bf16.mxu0 %v83
    %385 = vmatpush1.bf16.msra.mxu0 %v82
    %386 = vmatprep.subr.bf16.mxu0 %v85
    %387 = vmatpush1.bf16.msra.mxu0 %v84
    %388 = vmatprep.subr.bf16.mxu0 0
    %389 = vmatpush1.bf16.msra.mxu0 0
    %390 = vmatprep.subr.bf16.mxu0 0
    %391 = vmatpush1.bf16.msra.mxu0 0
    %392 = vmatprep.subr.bf16.mxu0 0
    %393 = vmatpush1.bf16.msra.mxu0 0
    %394 = vmatprep.subr.bf16.mxu0 0
    %395 = vmatpush1.bf16.msra.mxu0 0
    %396 = vmatprep.subr.bf16.mxu0 0
    %397 = vmatpush1.bf16.msra.mxu0 0
    %398 = vmatprep.subr.bf16.mxu0 0
    %399 = vmatpush1.bf16.msra.mxu0 0
    %400 = vmatprep.subr.bf16.mxu0 0
    %401 = vmatpush1.bf16.msra.mxu0 0
    %402 = vmatprep.subr.bf16.mxu0 0
    %403 = vmatpush1.bf16.msra.mxu0 0
    %404 = vmatprep.subr.bf16.mxu0 0
    %405 = vmatpush1.bf16.msra.mxu0 0
    %406 = vmatprep.subr.bf16.mxu0 0
    %407 = vmatpush1.bf16.msra.mxu0 0
    %408 = vmatprep.subr.bf16.mxu0 0
    %409 = vmatpush1.bf16.msra.mxu0 0
    %410 = vmatprep.subr.bf16.mxu0 0
    %411 = vmatpush1.bf16.msra.mxu0 0
    %412 = vmatprep.mubr.bf16.mxu0 0
    %413 = vmatmul.mubr.bf16.gmra.mrb[0].mxu0 %v378
    %v414 = vpop.f32.mrb[0].mxu0
    %v415 = vadd.f32 0.0, %v414
    %v416 = vpop.f32.mrb[0].mxu0
    %v417 = vadd.f32 0.0, %v416
    %v418 = vpop.f32.mrb[0].mxu0
    %v419 = vpop.f32.mrb[0].mxu0
    %420 = vdwg.mxu0
    %v423 = vcombine.low %v415, %v417
    %v425 = vunpack.c.l.s4 1983009808
    %v426 = vunpack.c.0.s8 %v425
    %v427 = vlaneseq
    %v428 = vshrl.u32 %v427, 7
    %v429 = vsub.s32 %v426, %v428
    %v430 = vrot.slane %v423, %v429
    %v432 = vadd.f32 %v376, %v430
    %v433 = vxor.u32 %v432, 2147483648
    %v434 = vmul.f32 %v433, 1.442695
    %v435 = vpow.pop %v434
    %v436 = vadd.f32 %v435, 1.0
    %v437 = vrcp.pop %v436
    %v438 = vmul.f32 1.0, %v437
    %v440 = vrot.slane %v432, 2
    %v442 = vtanh.pop %v440
    %443 = vrot.lane.b32.xlu0 %v432, 64
    %v444 = vpop.permute.xlu0 %443
    %v445 = vrot.slane %v444, 2
    %v447 = vxor.u32 %v445, 2147483648
    %v448 = vmul.f32 %v447, 1.442695
    %v449 = vpow.pop %v448
    %v450 = vadd.f32 %v449, 1.0
    %v451 = vrcp.pop %v450
    %v452 = vmul.f32 1.0, %v451
    %v453 = vmul.f32 %v438, %v365
    %v454 = vmul.f32 %v438, %v442
    %456 = vrot.lane.b32.xlu0 %v454, 64
    %v457 = vpop.permute.xlu0 %456
    %v459 = vadd.f32 %v453, %v457
    %v460 = vtanh.pop %v459
    %462 = vrot.lane.b32.xlu0 %v460, 64
    %v463 = vpop.permute.xlu0 %462
    %v465 = vmul.f32 %v452, %v463
    %v466 = vpack.c.bf16 %v465, %v465
    %s467 = scalar_lea.vmem [#allocation7], 6
    %468 = vst.msk [vmem:[%s467] sm:$0x3] %vm185, %v465
    %s469 = scalar_lea.vmem [#allocation2], 16
    %v470 = vld [vmem:[%s469] sm:$0xf]
    %v472 = vsel %vm94, %v466, 0
    %474 = vmatprep.subr.bf16.mxu0 %v79
    %475 = vmatpush1.bf16.msra.mxu0 %v78
    %476 = vmatprep.subr.bf16.mxu0 %v81
    %477 = vmatpush1.bf16.msra.mxu0 %v80
    %478 = vmatprep.subr.bf16.mxu0 %v83
    %479 = vmatpush1.bf16.msra.mxu0 %v82
    %480 = vmatprep.subr.bf16.mxu0 %v85
    %481 = vmatpush1.bf16.msra.mxu0 %v84
    %482 = vmatprep.subr.bf16.mxu0 0
    %483 = vmatpush1.bf16.msra.mxu0 0
    %484 = vmatprep.subr.bf16.mxu0 0
    %485 = vmatpush1.bf16.msra.mxu0 0
    %486 = vmatprep.subr.bf16.mxu0 0
    %487 = vmatpush1.bf16.msra.mxu0 0
    %488 = vmatprep.subr.bf16.mxu0 0
    %489 = vmatpush1.bf16.msra.mxu0 0
    %490 = vmatprep.subr.bf16.mxu0 0
    %491 = vmatpush1.bf16.msra.mxu0 0
    %492 = vmatprep.subr.bf16.mxu0 0
    %493 = vmatpush1.bf16.msra.mxu0 0
    %494 = vmatprep.subr.bf16.mxu0 0
    %495 = vmatpush1.bf16.msra.mxu0 0
    %496 = vmatprep.subr.bf16.mxu0 0
    %497 = vmatpush1.bf16.msra.mxu0 0
    %498 = vmatprep.subr.bf16.mxu0 0
    %499 = vmatpush1.bf16.msra.mxu0 0
    %500 = vmatprep.subr.bf16.mxu0 0
    %501 = vmatpush1.bf16.msra.mxu0 0
    %502 = vmatprep.subr.bf16.mxu0 0
    %503 = vmatpush1.bf16.msra.mxu0 0
    %504 = vmatprep.subr.bf16.mxu0 0
    %505 = vmatpush1.bf16.msra.mxu0 0
    %506 = vmatprep.mubr.bf16.mxu0 0
    %507 = vmatmul.mubr.bf16.gmra.mrb[0].mxu0 %v472
    %v508 = vpop.f32.mrb[0].mxu0
    %v509 = vadd.f32 0.0, %v508
    %v510 = vpop.f32.mrb[0].mxu0
    %v511 = vadd.f32 0.0, %v510
    %v512 = vpop.f32.mrb[0].mxu0
    %v513 = vpop.f32.mrb[0].mxu0
    %514 = vdwg.mxu0
    %v517 = vcombine.low %v509, %v511
    %v519 = vunpack.c.l.s4 1983009808
    %v520 = vunpack.c.0.s8 %v519
    %v521 = vlaneseq
    %v522 = vshrl.u32 %v521, 7
    %v523 = vsub.s32 %v520, %v522
    %v524 = vrot.slane %v517, %v523
    %v526 = vadd.f32 %v470, %v524
    %v527 = vxor.u32 %v526, 2147483648
    %v528 = vmul.f32 %v527, 1.442695
    %v529 = vpow.pop %v528
    %v530 = vadd.f32 %v529, 1.0
    %v531 = vrcp.pop %v530
    %v532 = vmul.f32 1.0, %v531
    %v534 = vrot.slane %v526, 2
    %v536 = vtanh.pop %v534
    %537 = vrot.lane.b32.xlu0 %v526, 64
    %v538 = vpop.permute.xlu0 %537
    %v539 = vrot.slane %v538, 2
    %v541 = vxor.u32 %v539, 2147483648
    %v542 = vmul.f32 %v541, 1.442695
    %v543 = vpow.pop %v542
    %v544 = vadd.f32 %v543, 1.0
    %v545 = vrcp.pop %v544
    %v546 = vmul.f32 1.0, %v545
    %v547 = vmul.f32 %v532, %v459
    %v548 = vmul.f32 %v532, %v536
    %550 = vrot.lane.b32.xlu0 %v548, 64
    %v551 = vpop.permute.xlu0 %550
    %v553 = vadd.f32 %v547, %v551
    %v554 = vtanh.pop %v553
    %556 = vrot.lane.b32.xlu0 %v554, 64
    %v557 = vpop.permute.xlu0 %556
    %v559 = vmul.f32 %v546, %v557
    %v560 = vpack.c.bf16 %v559, %v559
    %s561 = scalar_lea.vmem [#allocation7], 8
    %562 = vst.msk [vmem:[%s561] sm:$0x3] %vm185, %v559
    %s563 = scalar_lea.vmem [#allocation2], 20
    %v564 = vld [vmem:[%s563] sm:$0xf]
    %v566 = vsel %vm94, %v560, 0
    %568 = vmatprep.subr.bf16.mxu0 %v79
    %569 = vmatpush1.bf16.msra.mxu0 %v78
    %570 = vmatprep.subr.bf16.mxu0 %v81
    %571 = vmatpush1.bf16.msra.mxu0 %v80
    %572 = vmatprep.subr.bf16.mxu0 %v83
    %573 = vmatpush1.bf16.msra.mxu0 %v82
    %574 = vmatprep.subr.bf16.mxu0 %v85
    %575 = vmatpush1.bf16.msra.mxu0 %v84
    %576 = vmatprep.subr.bf16.mxu0 0
    %577 = vmatpush1.bf16.msra.mxu0 0
    %578 = vmatprep.subr.bf16.mxu0 0
    %579 = vmatpush1.bf16.msra.mxu0 0
    %580 = vmatprep.subr.bf16.mxu0 0
    %581 = vmatpush1.bf16.msra.mxu0 0
    %582 = vmatprep.subr.bf16.mxu0 0
    %583 = vmatpush1.bf16.msra.mxu0 0
    %584 = vmatprep.subr.bf16.mxu0 0
    %585 = vmatpush1.bf16.msra.mxu0 0
    %586 = vmatprep.subr.bf16.mxu0 0
    %587 = vmatpush1.bf16.msra.mxu0 0
    %588 = vmatprep.subr.bf16.mxu0 0
    %589 = vmatpush1.bf16.msra.mxu0 0
    %590 = vmatprep.subr.bf16.mxu0 0
    %591 = vmatpush1.bf16.msra.mxu0 0
    %592 = vmatprep.subr.bf16.mxu0 0
    %593 = vmatpush1.bf16.msra.mxu0 0
    %594 = vmatprep.subr.bf16.mxu0 0
    %595 = vmatpush1.bf16.msra.mxu0 0
    %596 = vmatprep.subr.bf16.mxu0 0
    %597 = vmatpush1.bf16.msra.mxu0 0
    %598 = vmatprep.subr.bf16.mxu0 0
    %599 = vmatpush1.bf16.msra.mxu0 0
    %600 = vmatprep.mubr.bf16.mxu0 0
    %601 = vmatmul.mubr.bf16.gmra.mrb[0].mxu0 %v566
    %v602 = vpop.f32.mrb[0].mxu0
    %v603 = vadd.f32 0.0, %v602
    %v604 = vpop.f32.mrb[0].mxu0
    %v605 = vadd.f32 0.0, %v604
    %v606 = vpop.f32.mrb[0].mxu0
    %v607 = vpop.f32.mrb[0].mxu0
    %608 = vdwg.mxu0
    %v611 = vcombine.low %v603, %v605
    %v613 = vunpack.c.l.s4 1983009808
    %v614 = vunpack.c.0.s8 %v613
    %v615 = vlaneseq
    %v616 = vshrl.u32 %v615, 7
    %v617 = vsub.s32 %v614, %v616
    %v618 = vrot.slane %v611, %v617
    %v620 = vadd.f32 %v564, %v618
    %v621 = vxor.u32 %v620, 2147483648
    %v622 = vmul.f32 %v621, 1.442695
    %v623 = vpow.pop %v622
    %v624 = vadd.f32 %v623, 1.0
    %v625 = vrcp.pop %v624
    %v626 = vmul.f32 1.0, %v625
    %v628 = vrot.slane %v620, 2
    %v630 = vtanh.pop %v628
    %631 = vrot.lane.b32.xlu0 %v620, 64
    %v632 = vpop.permute.xlu0 %631
    %v633 = vrot.slane %v632, 2
    %v635 = vxor.u32 %v633, 2147483648
    %v636 = vmul.f32 %v635, 1.442695
    %v637 = vpow.pop %v636
    %v638 = vadd.f32 %v637, 1.0
    %v639 = vrcp.pop %v638
    %v640 = vmul.f32 1.0, %v639
    %v641 = vmul.f32 %v626, %v553
    %v642 = vmul.f32 %v626, %v630
    %644 = vrot.lane.b32.xlu0 %v642, 64
    %v645 = vpop.permute.xlu0 %644
    %v647 = vadd.f32 %v641, %v645
    %v648 = vtanh.pop %v647
    %650 = vrot.lane.b32.xlu0 %v648, 64
    %v651 = vpop.permute.xlu0 %650
    %v653 = vmul.f32 %v640, %v651
    %v654 = vpack.c.bf16 %v653, %v653
    %s655 = scalar_lea.vmem [#allocation7], 10
    %656 = vst.msk [vmem:[%s655] sm:$0x3] %vm185, %v653
    %s657 = scalar_lea.vmem [#allocation2], 24
    %v658 = vld [vmem:[%s657] sm:$0xf]
    %v660 = vsel %vm94, %v654, 0
    %662 = vmatprep.subr.bf16.mxu0 %v79
    %663 = vmatpush1.bf16.msra.mxu0 %v78
    %664 = vmatprep.subr.bf16.mxu0 %v81
    %665 = vmatpush1.bf16.msra.mxu0 %v80
    %666 = vmatprep.subr.bf16.mxu0 %v83
    %667 = vmatpush1.bf16.msra.mxu0 %v82
    %668 = vmatprep.subr.bf16.mxu0 %v85
    %669 = vmatpush1.bf16.msra.mxu0 %v84
    %670 = vmatprep.subr.bf16.mxu0 0
    %671 = vmatpush1.bf16.msra.mxu0 0
    %672 = vmatprep.subr.bf16.mxu0 0
    %673 = vmatpush1.bf16.msra.mxu0 0
    %674 = vmatprep.subr.bf16.mxu0 0
    %675 = vmatpush1.bf16.msra.mxu0 0
    %676 = vmatprep.subr.bf16.mxu0 0
    %677 = vmatpush1.bf16.msra.mxu0 0
    %678 = vmatprep.subr.bf16.mxu0 0
    %679 = vmatpush1.bf16.msra.mxu0 0
    %680 = vmatprep.subr.bf16.mxu0 0
    %681 = vmatpush1.bf16.msra.mxu0 0
    %682 = vmatprep.subr.bf16.mxu0 0
    %683 = vmatpush1.bf16.msra.mxu0 0
    %684 = vmatprep.subr.bf16.mxu0 0
    %685 = vmatpush1.bf16.msra.mxu0 0
    %686 = vmatprep.subr.bf16.mxu0 0
    %687 = vmatpush1.bf16.msra.mxu0 0
    %688 = vmatprep.subr.bf16.mxu0 0
    %689 = vmatpush1.bf16.msra.mxu0 0
    %690 = vmatprep.subr.bf16.mxu0 0
    %691 = vmatpush1.bf16.msra.mxu0 0
    %692 = vmatprep.subr.bf16.mxu0 0
    %693 = vmatpush1.bf16.msra.mxu0 0
    %694 = vmatprep.mubr.bf16.mxu0 0
    %695 = vmatmul.mubr.bf16.gmra.mrb[0].mxu0 %v660
    %v696 = vpop.f32.mrb[0].mxu0
    %v697 = vadd.f32 0.0, %v696
    %v698 = vpop.f32.mrb[0].mxu0
    %v699 = vadd.f32 0.0, %v698
    %v700 = vpop.f32.mrb[0].mxu0
    %v701 = vpop.f32.mrb[0].mxu0
    %702 = vdwg.mxu0
    %v705 = vcombine.low %v697, %v699
    %v707 = vunpack.c.l.s4 1983009808
    %v708 = vunpack.c.0.s8 %v707
    %v709 = vlaneseq
    %v710 = vshrl.u32 %v709, 7
    %v711 = vsub.s32 %v708, %v710
    %v712 = vrot.slane %v705, %v711
    %v714 = vadd.f32 %v658, %v712
    %v715 = vxor.u32 %v714, 2147483648
    %v716 = vmul.f32 %v715, 1.442695
    %v717 = vpow.pop %v716
    %v718 = vadd.f32 %v717, 1.0
    %v719 = vrcp.pop %v718
    %v720 = vmul.f32 1.0, %v719
    %v722 = vrot.slane %v714, 2
    %v724 = vtanh.pop %v722
    %725 = vrot.lane.b32.xlu0 %v714, 64
    %v726 = vpop.permute.xlu0 %725
    %v727 = vrot.slane %v726, 2
    %v729 = vxor.u32 %v727, 2147483648
    %v730 = vmul.f32 %v729, 1.442695
    %v731 = vpow.pop %v730
    %v732 = vadd.f32 %v731, 1.0
    %v733 = vrcp.pop %v732
    %v734 = vmul.f32 1.0, %v733
    %v735 = vmul.f32 %v720, %v647
    %v736 = vmul.f32 %v720, %v724
    %738 = vrot.lane.b32.xlu0 %v736, 64
    %v739 = vpop.permute.xlu0 %738
    %v741 = vadd.f32 %v735, %v739
    %v742 = vtanh.pop %v741
    %744 = vrot.lane.b32.xlu0 %v742, 64
    %v745 = vpop.permute.xlu0 %744
    %v747 = vmul.f32 %v734, %v745
    %v748 = vpack.c.bf16 %v747, %v747
    %s749 = scalar_lea.vmem [#allocation7], 12
    %750 = vst.msk [vmem:[%s749] sm:$0x3] %vm185, %v747
    %s751 = scalar_lea.vmem [#allocation2], 28
    %v752 = vld [vmem:[%s751] sm:$0xf]
    %v754 = vsel %vm94, %v748, 0
    %756 = vmatprep.subr.bf16.mxu0 %v79
    %757 = vmatpush1.bf16.msra.mxu0 %v78
    %758 = vmatprep.subr.bf16.mxu0 %v81
    %759 = vmatpush1.bf16.msra.mxu0 %v80
    %760 = vmatprep.subr.bf16.mxu0 %v83
    %761 = vmatpush1.bf16.msra.mxu0 %v82
    %762 = vmatprep.subr.bf16.mxu0 %v85
    %763 = vmatpush1.bf16.msra.mxu0 %v84
    %764 = vmatprep.subr.bf16.mxu0 0
    %765 = vmatpush1.bf16.msra.mxu0 0
    %766 = vmatprep.subr.bf16.mxu0 0
    %767 = vmatpush1.bf16.msra.mxu0 0
    %768 = vmatprep.subr.bf16.mxu0 0
    %769 = vmatpush1.bf16.msra.mxu0 0
    %770 = vmatprep.subr.bf16.mxu0 0
    %771 = vmatpush1.bf16.msra.mxu0 0
    %772 = vmatprep.subr.bf16.mxu0 0
    %773 = vmatpush1.bf16.msra.mxu0 0
    %774 = vmatprep.subr.bf16.mxu0 0
    %775 = vmatpush1.bf16.msra.mxu0 0
    %776 = vmatprep.subr.bf16.mxu0 0
    %777 = vmatpush1.bf16.msra.mxu0 0
    %778 = vmatprep.subr.bf16.mxu0 0
    %779 = vmatpush1.bf16.msra.mxu0 0
    %780 = vmatprep.subr.bf16.mxu0 0
    %781 = vmatpush1.bf16.msra.mxu0 0
    %782 = vmatprep.subr.bf16.mxu0 0
    %783 = vmatpush1.bf16.msra.mxu0 0
    %784 = vmatprep.subr.bf16.mxu0 0
    %785 = vmatpush1.bf16.msra.mxu0 0
    %786 = vmatprep.subr.bf16.mxu0 0
    %787 = vmatpush1.bf16.msra.mxu0 0
    %788 = vmatprep.mubr.bf16.mxu0 0
    %789 = vmatmul.mubr.bf16.gmra.mrb[0].mxu0 %v754
    %v790 = vpop.f32.mrb[0].mxu0
    %v791 = vadd.f32 0.0, %v790
    %v792 = vpop.f32.mrb[0].mxu0
    %v793 = vadd.f32 0.0, %v792
    %v794 = vpop.f32.mrb[0].mxu0
    %v795 = vpop.f32.mrb[0].mxu0
    %796 = vdwg.mxu0
    %v799 = vcombine.low %v791, %v793
    %v801 = vunpack.c.l.s4 1983009808
    %v802 = vunpack.c.0.s8 %v801
    %v803 = vlaneseq
    %v804 = vshrl.u32 %v803, 7
    %v805 = vsub.s32 %v802, %v804
    %v806 = vrot.slane %v799, %v805
    %v808 = vadd.f32 %v752, %v806
    %v809 = vxor.u32 %v808, 2147483648
    %v810 = vmul.f32 %v809, 1.442695
    %v811 = vpow.pop %v810
    %v812 = vadd.f32 %v811, 1.0
    %v813 = vrcp.pop %v812
    %v814 = vmul.f32 1.0, %v813
    %v816 = vrot.slane %v808, 2
    %v818 = vtanh.pop %v816
    %819 = vrot.lane.b32.xlu0 %v808, 64
    %v820 = vpop.permute.xlu0 %819
    %v821 = vrot.slane %v820, 2
    %v823 = vxor.u32 %v821, 2147483648
    %v824 = vmul.f32 %v823, 1.442695
    %v825 = vpow.pop %v824
    %v826 = vadd.f32 %v825, 1.0
    %v827 = vrcp.pop %v826
    %v828 = vmul.f32 1.0, %v827
    %v829 = vmul.f32 %v814, %v741
    %v830 = vmul.f32 %v814, %v818
    %832 = vrot.lane.b32.xlu0 %v830, 64
    %v833 = vpop.permute.xlu0 %832
    %v835 = vadd.f32 %v829, %v833
    %v836 = vtanh.pop %v835
    %838 = vrot.lane.b32.xlu0 %v836, 64
    %v839 = vpop.permute.xlu0 %838
    %v841 = vmul.f32 %v828, %v839
    %s842 = scalar_lea.vmem [#allocation7], 14
    %843 = vst.msk [vmem:[%s842] sm:$0x3] %vm185, %v841
    %844 = vst.msk [vmem:[#allocation8] sm:$0x3] %vm185, %v841
    %v847 = vunpack.c.l.s4 1983009808
    %v848 = vunpack.c.0.s8 %v847
    %v849 = vlaneseq
    %v850 = vshrl.u32 %v849, 7
    %v851 = vsub.s32 %v848, %v850
    %v852 = vrot.slane %v835, %v851
    %853 = vrot.lane.b32.xlu0 %v852, 64
    %v854 = vpop.permute.xlu0 %853
    %856 = vst.msk [vmem:[#allocation10] sm:$0x3] %vm185, %v854
    // Predicated region
    $region18: #{tpu_custom_call.1} parent=1 // pred_check
      _
    $region19: #{tpu_custom_call.1} parent=1 // pred_check_branch
      %858 = sbr.rel (0) target = $region21
    $region20: #{tpu_custom_call.1} parent=1 // pred_region
      %s860 = ssub.s32 256, 256
      %861 = vsyncadd [#allocation4], %s860
      %s862 = sshll.u32 [#allocation7], 4
      %s863 = int_to_ptr.vmem [resolvable:$true] %s862
      %868 = dma.vmem_to_hbm [thread:$0]  %s863, 256, %s2, [#allocation4], 32, 32, 2
    $region21: #{tpu_custom_call.1} parent=1 // pred_fallthru
      _
    // Predicated region
    $region22: #{tpu_custom_call.1} parent=1 // pred_check
      _
    $region23: #{tpu_custom_call.1} parent=1 // pred_check_branch
      %870 = sbr.rel (0) target = $region25
    $region24: #{tpu_custom_call.1} parent=1 // pred_region
      %s872 = ssub.s32 32, 32
      %873 = vsyncadd [#allocation9], %s872
      %s875 = sshll.u32 [#allocation8], 4
      %s876 = int_to_ptr.vmem [resolvable:$true] %s875
      %878 = dma.vmem_to_hbm [thread:$0]  %s876, 32, %s3, [#allocation9]
    $region25: #{tpu_custom_call.1} parent=1 // pred_fallthru
      _
    // Predicated region
    $region26: #{tpu_custom_call.1} parent=1 // pred_check
      _
    $region27: #{tpu_custom_call.1} parent=1 // pred_check_branch
      %880 = sbr.rel (0) target = $region29
    $region28: #{tpu_custom_call.1} parent=1 // pred_region
      %s882 = ssub.s32 32, 32
      %883 = vsyncadd [#allocation9], %s882
      %s885 = sshll.u32 [#allocation10], 4
      %s886 = int_to_ptr.vmem [resolvable:$true] %s885
      %888 = dma.vmem_to_hbm [thread:$0]  %s886, 32, %s4, [#allocation9]
    $region29: #{tpu_custom_call.1} parent=1 // pred_fallthru
      _
    // Predicated region
    $region30: #{tpu_custom_call.1} parent=1 // pred_check
      _
    $region31: #{tpu_custom_call.1} parent=1 // pred_check_branch
      %890 = sbr.rel (0) target = $region33
    $region32: #{tpu_custom_call.1} parent=1 // pred_region
      %891 = dma.done [#allocation4], 256
    $region33: #{tpu_custom_call.1} parent=1 // pred_fallthru
      _
    // Predicated region
    $region34: #{tpu_custom_call.1} parent=1 // pred_check
      _
    $region35: #{tpu_custom_call.1} parent=1 // pred_check_branch
      %893 = sbr.rel (0) target = $region37
    $region36: #{tpu_custom_call.1} parent=1 // pred_region
      %894 = dma.done [#allocation9], 32
    $region37: #{tpu_custom_call.1} parent=1 // pred_fallthru
      _
    // Predicated region
    $region38: #{tpu_custom_call.1} parent=1 // pred_check
      _
    $region39: #{tpu_custom_call.1} parent=1 // pred_check_branch
      %896 = sbr.rel (0) target = $region41
    $region40: #{tpu_custom_call.1} parent=1 // pred_region
      %897 = dma.done [#allocation9], 32
    $region41: #{tpu_custom_call.1} parent=1 // pred_fallthru
      _
    %898 = vsyncpa [#allocation3], 1
    %899 = vsyncpa [#allocation6], 1
    %900 = vsyncpa [#allocation4], 1
    %901 = vsyncpa [#allocation9], 1

</llo_original>
